<compile_context>
chip_gen: v7x
topology: tpu7x:2x2x1
jax: 0.10.0
libtpu: 0.0.40
codegen_flags: <defaults>
</compile_context>

<pallas_src>
import jax
import jax.numpy as jnp
from jax.experimental import pallas as pl
from jax.experimental.pallas import tpu as pltpu


def _vmem_capacity_bytes():
    try:
        return int(pltpu.get_tpu_info().vmem_capacity_bytes)
    except Exception:
        return 64 << 20  # conservative default (v7x-sized VMEM)


def _largest_divisor(n, upper, multiple_of=1):
    """Largest d <= upper with d % multiple_of == 0 and n % d == 0 (None if none)."""
    upper = min(upper, n)
    upper -= upper % multiple_of
    d = upper
    while d >= multiple_of:
        if n % d == 0:
            return d
        d -= multiple_of
    return None


def _choose_tiles(n_rows, d, itemsize, sublane_mult, block_target):
    """Pick (tile_rows, tile_lanes) with per-block bytes ~<= block_target."""
    if d % 128 == 0:
        k = d // 128
        max_k = max(1, block_target // (sublane_mult * 128 * itemsize))
        kk = _largest_divisor(k, max_k) or 1          # 1 always divides -> never runaway
        tile_d = kk * 128
    else:
        tile_d = d                                    # full-array-dim exception, no padding
    max_rows = max(sublane_mult, block_target // max(1, tile_d * itemsize))
    tile_r = _largest_divisor(n_rows, max_rows, sublane_mult)
    if tile_r is None:
        # No sublane-aligned row tiling divides n_rows: keep all rows resident
        # (full-dim exception) and shrink the lane tile so the block stays in budget.
        tile_r = n_rows
        if d % 128 == 0 and tile_r * tile_d * itemsize > block_target:
            max_k2 = max(1, block_target // max(1, tile_r * 128 * itemsize))
            tile_d = (_largest_divisor(d // 128, max_k2) or 1) * 128
    return tile_r, tile_d


def _make_kernel(tile_r, tile_d, write_target):
    """Grid = (row_tiles, d_tiles); d (lanes) is the innermost, sequential axis."""

    def kernel(mask_ref, preds_ref, target_ref, *rest):
        if write_target:
            preds_out_ref, target_out_ref, sse_ref, acc_ref = rest
        else:
            preds_out_ref, sse_ref, acc_ref = rest
            target_out_ref = None

        j = pl.program_id(1)
        nj = pl.num_programs(1)

        # Fresh accumulator at the start of each row tile's lane sweep.
        @pl.when(j == 0)
        def _():
            acc_ref[...] = jnp.zeros_like(acc_ref)

        # Native-dtype stream, f32 math per-vreg only inside the kernel.
        p = preds_ref[...].astype(jnp.float32)
        t = target_ref[...].astype(jnp.float32)
        m = mask_ref[...]                              # (tile_r, 1) f32, 1.0 => context

        # torch.clamp(torch.nan_to_num(x, nan=0.0), 0.0, 1.0)
        p = jnp.clip(jnp.where(jnp.isnan(p), 0.0, p), 0.0, 1.0)
        t = jnp.clip(jnp.where(jnp.isnan(t), 0.0, t), 0.0, 1.0)
        # preds = where(context_mask, target, preds) -- broadcast over lanes
        p = jnp.where(m > 0.5, t, p)

        preds_out_ref[...] = p.astype(preds_out_ref.dtype)
        if write_target:
            target_out_ref[...] = t.astype(target_out_ref.dtype)

        # Squared error. Context rows already have diff == 0 (p was overwritten with t),
        # so no mask multiply is needed.
        diff = p - t
        sq = diff * diff

        if tile_d % 128 == 0:
            # Lane-preserving VALU reduction: static loop of 128-lane slices (no reshape).
            part = sq[:, 0:128]
            for kk in range(1, tile_d // 128):
                part = part + sq[:, kk * 128:(kk + 1) * 128]
        else:
            # Ragged full-D block: per-row lane reduce, parked in lane 0.
            row_sum = jnp.sum(sq, axis=-1, keepdims=True)          # (tile_r, 1)
            lane0 = jax.lax.broadcasted_iota(jnp.int32, (tile_r, 128), 1) == 0
            part = jnp.where(lane0, row_sum, 0.0)
        acc_ref[...] += part

        # Collapse the resident accumulator to one (8, 128) partial per row tile.
        @pl.when(j == nj - 1)
        def _():
            acc = acc_ref[...]
            if tile_r % 8 == 0:
                out = acc[0:8, :]
                for gg in range(1, tile_r // 8):
                    out = out + acc[gg * 8:(gg + 1) * 8, :]
                sse_ref[...] = out
            else:  # fallback when the row tile is a non-multiple-of-8 full extent
                s = jnp.sum(acc)
                r = jax.lax.broadcasted_iota(jnp.int32, (8, 128), 0)
                c = jax.lax.broadcasted_iota(jnp.int32, (8, 128), 1)
                sse_ref[...] = jnp.where((r == 0) & (c == 0), s, 0.0)

    return kernel


def _video_metric_impl(preds, target, context_mask, *, tile_rows, tile_lanes,
                       return_target, alias):
    """Pallas equivalent of VideoMetric._update (MSE/PSNR subset), whole batch at once."""
    b, t, c, h, w = preds.shape
    in_dtype = preds.dtype
    itemsize = jnp.dtype(in_dtype).itemsize
    sublane_mult = {4: 8, 2: 16, 1: 32}.get(itemsize, 8)

    vmem_cap = _vmem_capacity_bytes()
    # Roofline saturates around 0.5-4 MiB blocks; bigger only adds DMA latency tails and
    # VMEM pressure (64 MiB on v7x).
    block_target = max(512 << 10, min(4 << 20, vmem_cap // 24))

    # ---- choose the (rows, lanes) flatten: no host-side padding in any case ----------
    d_full = c * h * w
    if d_full % 128 == 0:
        n, d, rep = b * t, d_full, 1
    else:
        # Ragged frame size: keep lanes as large as possible while a minimal
        # (sublane_mult rows x full lanes) block still fits the budget; the block's
        # last dim equals the full array dim so no padding is ever materialized.
        n, d, rep = b * t * c * h, w, c * h
        for dd, rr in ((d_full, 1), (h * w, c)):
            if sublane_mult * dd * itemsize <= block_target:
                n, d, rep = b * t * rr, dd, rr
                break

    p2 = preds.reshape(n, d)
    t2 = target.reshape(n, d)
    mask_f = context_mask.astype(jnp.float32)
    # row r corresponds to frame t = (r // rep) % T (b-major flatten)
    mask_rows = jnp.tile(jnp.repeat(mask_f, rep), (b,)).reshape(n, 1)

    auto_r, auto_d = _choose_tiles(n, d, itemsize, sublane_mult, block_target)
    tile_r = tile_rows if tile_rows is not None else auto_r
    tile_d = tile_lanes if tile_lanes is not None else auto_d
    assert tile_r == n or (n % tile_r == 0 and tile_r % sublane_mult == 0), (n, tile_r)
    assert tile_d == d or (d % tile_d == 0 and tile_d % 128 == 0), (d, tile_d)

    n_row_tiles = n // tile_r
    n_d_tiles = d // tile_d
    grid = (n_row_tiles, n_d_tiles)

    row_map = lambda i, j: (i, j)
    mask_map = lambda i, j: (i, 0)     # same block across j -> fetched once per row tile
    sse_map = lambda i, j: (i, 0)      # one (8,128) partial per row tile

    in_specs = [
        pl.BlockSpec((tile_r, 1), mask_map),           # context mask rows (f32)
        pl.BlockSpec((tile_r, tile_d), row_map),       # preds rows (native dtype)
        pl.BlockSpec((tile_r, tile_d), row_map),       # target rows (native dtype)
    ]
    out_specs = [pl.BlockSpec((tile_r, tile_d), row_map)]
    out_shape = [jax.ShapeDtypeStruct((n, d), in_dtype)]
    if return_target:
        out_specs.append(pl.BlockSpec((tile_r, tile_d), row_map))
        out_shape.append(jax.ShapeDtypeStruct((n, d), in_dtype))
    out_specs.append(pl.BlockSpec((8, 128), sse_map))
    out_shape.append(jax.ShapeDtypeStruct((n_row_tiles * 8, 128), jnp.float32))

    block_bytes = tile_r * tile_d * itemsize
    n_streams = 2 + (2 if return_target else 1)        # video in/out HBM streams
    est = (2 * n_streams * block_bytes                 # double-buffered video blocks
           + 3 * tile_r * 128 * 4                      # mask blocks + accumulator
           + 2 * 8 * 128 * 4)                          # sse partial blocks
    vmem_limit = int(min(int(0.9 * vmem_cap), max(32 << 20, est + (4 << 20))))

    aliases = {}
    if alias:                      # only pays when the jit arguments are donated
        aliases[1] = 0
        if return_target:
            aliases[2] = 1

    outs = pl.pallas_call(
        _make_kernel(tile_r, tile_d, return_target),
        grid=grid,
        in_specs=in_specs,
        out_specs=out_specs,
        out_shape=out_shape,
        scratch_shapes=[pltpu.VMEM((tile_r, 128), jnp.float32)],
        input_output_aliases=aliases,
        compiler_params=pltpu.CompilerParams(
            dimension_semantics=("parallel", "arbitrary"),
            vmem_limit_bytes=vmem_limit),
    )(mask_rows, p2, t2)

    if return_target:
        p_out, t_out, sse_parts = outs
        t_out = t_out.reshape(b, t, c, h, w)
    else:
        p_out, sse_parts = outs
        t_out = None
    p_out = p_out.reshape(b, t, c, h, w)

    sse = jnp.sum(sse_parts)
    # Exact element count: every float factor stays well below 2^24, so no rounding bias.
    keep_frames = jnp.sum(jnp.logical_not(context_mask).astype(jnp.int32)).astype(jnp.float32)
    mse = sse / (keep_frames * jnp.float32(b) * jnp.float32(c)) / jnp.float32(h * w)
    psnr = -10.0 * jnp.log10(mse)                      # data_range = 1.0
    return p_out, t_out, mse, psnr


_STATIC = ("tile_rows", "tile_lanes", "return_target", "alias")
_impl = jax.jit(_video_metric_impl, static_argnames=_STATIC)
# Donating preds/target lets input_output_aliases reuse the input HBM buffers in place
# (without donation XLA would insert defensive copies, so aliasing is then disabled).
_impl_donate = jax.jit(_video_metric_impl, static_argnames=_STATIC, donate_argnums=(0, 1))


def video_metric_forward(preds, target, context_mask=None, split_batch_size=16, *,
                         tile_rows=None, tile_lanes=None,
                         return_processed_target=True, donate_inputs=False):
    """
    Mirrors VideoMetric.forward for the MSE / PSNR (data_range=1.0) subset and returns the
    preprocessed videos in the INPUT dtype (casting them to f32 downstream is lossless,
    matching the original module's `.to(torch.float32)`). torch.chunk batch splitting only
    bounds host/device memory of the torchmetrics updates; the accumulated MSE / PSNR state
    is identical, so everything is fused into a single pallas_call.
    """
    B, T, C, H, W = preds.shape
    assert target.shape == preds.shape, "Batch size of preds and target must be the same."
    del split_batch_size  # chunking is a host-memory artifact, not a semantic one
    if context_mask is None:
        context_mask = jnp.zeros((T,), dtype=bool)

    fn = _impl_donate if donate_inputs else _impl
    p_out, t_out, mse, psnr = fn(preds, target, context_mask,
                                 tile_rows=tile_rows, tile_lanes=tile_lanes,
                                 return_target=return_processed_target,
                                 alias=donate_inputs)
    logs = {"val/mse": mse, "val/psnr": psnr}
    return p_out, t_out, logs


def _reference(preds, target, context_mask):
    """Pure-JAX reference of the implemented subset of VideoMetric._update."""
    p = jnp.clip(jnp.nan_to_num(preds.astype(jnp.float32), nan=0.0), 0.0, 1.0)
    t = jnp.clip(jnp.nan_to_num(target.astype(jnp.float32), nan=0.0), 0.0, 1.0)
    p = jnp.where(context_mask[None, :, None, None, None], t, p)
    keep = jnp.logical_not(context_mask)
    diff = (p - t) * keep.astype(jnp.float32)[None, :, None, None, None]
    B, T, C, H, W = preds.shape
    cnt = jnp.sum(keep.astype(jnp.int32)) * B * C * H * W
    mse = jnp.sum(diff * diff) / cnt
    psnr = -10.0 * jnp.log10(mse)
    return p, t, mse, psnr


if __name__ == "__main__":
    key = jax.random.PRNGKey(0)

    # ---- Test 1: f32, C*H*W multiple of 128, auto tiling ------------------------------
    B, T, C, H, W = 4, 8, 3, 16, 16            # C*H*W = 768 = 6*128 lanes; B*T = 32 rows
    k1, k2 = jax.random.split(key)
    preds = jax.random.uniform(k1, (B, T, C, H, W), jnp.float32, -0.2, 1.2)
    target = jax.random.uniform(k2, (B, T, C, H, W), jnp.float32, 0.0, 1.0)
    preds = preds.at[0, 3, 0, 0, :4].set(jnp.nan)               # exercise nan_to_num
    context_mask = jnp.array([1, 1, 0, 0, 0, 0, 0, 0], dtype=bool)

    p_ref, t_ref, mse_ref, psnr_ref = _reference(preds, target, context_mask)

    p1, t1, logs1 = video_metric_forward(preds, target, context_mask)
    jax.block_until_ready((p1, t1, logs1))
    assert jnp.allclose(p1, p_ref, atol=1e-6), "processed preds mismatch (auto tiles)"
    assert jnp.allclose(t1, t_ref, atol=1e-6), "processed target mismatch (auto tiles)"
    assert jnp.allclose(logs1["val/mse"], mse_ref, rtol=1e-5, atol=1e-8), "MSE mismatch (auto)"
    assert jnp.allclose(logs1["val/psnr"], psnr_ref, rtol=1e-4, atol=1e-4), "PSNR mismatch (auto)"

    # ---- Test 2: forced multi-tile grid (4 row tiles x 3 lane tiles) ------------------
    p2_, t2_, logs2 = video_metric_forward(preds, target, context_mask,
                                           tile_rows=8, tile_lanes=256)
    jax.block_until_ready((p2_, t2_, logs2))
    assert jnp.allclose(p2_, p_ref, atol=1e-6), "processed preds mismatch (tiled)"
    assert jnp.allclose(t2_, t_ref, atol=1e-6), "processed target mismatch (tiled)"
    assert jnp.allclose(logs2["val/mse"], mse_ref, rtol=1e-5, atol=1e-8), "MSE mismatch (tiled)"
    assert jnp.allclose(logs2["val/psnr"], psnr_ref, rtol=1e-4, atol=1e-4), "PSNR mismatch (tiled)"

    # ---- Test 3: native bf16 streaming, no processed-target output --------------------
    B3, T3 = 2, 16
    k3, k4 = jax.random.split(k1)
    preds_bf = jax.random.uniform(k3, (B3, T3, C, H, W), jnp.float32, -0.2, 1.2).astype(jnp.bfloat16)
    target_bf = jax.random.uniform(k4, (B3, T3, C, H, W), jnp.float32, 0.0, 1.0).astype(jnp.bfloat16)
    mask3 = jnp.array([1, 1] + [0] * 14, dtype=bool)
    p_ref3, _, mse_ref3, psnr_ref3 = _reference(preds_bf, target_bf, mask3)

    p3, t3, logs3 = video_metric_forward(preds_bf, target_bf, mask3,
                                         return_processed_target=False)
    jax.block_until_ready((p3, logs3))
    assert t3 is None
    assert p3.dtype == jnp.bfloat16, "processed preds should stay in the input dtype"
    assert jnp.allclose(p3.astype(jnp.float32), p_ref3, atol=1e-6), "processed preds mismatch (bf16)"
    assert jnp.allclose(logs3["val/mse"], mse_ref3, rtol=1e-4, atol=1e-7), "MSE mismatch (bf16)"
    assert jnp.allclose(logs3["val/psnr"], psnr_ref3, rtol=1e-4, atol=1e-4), "PSNR mismatch (bf16)"

    # ---- Test 4: ragged frame size (C*H*W = 432, not a multiple of 128) ---------------
    B4, T4, C4, H4, W4 = 2, 8, 3, 12, 12
    k5, k6 = jax.random.split(k2)
    preds_r = jax.random.uniform(k5, (B4, T4, C4, H4, W4), jnp.float32, -0.1, 1.1)
    target_r = jax.random.uniform(k6, (B4, T4, C4, H4, W4), jnp.float32, 0.0, 1.0)
    mask4 = jnp.array([1, 0, 0, 0, 0, 0, 0, 0], dtype=bool)
    p_ref4, t_ref4, mse_ref4, psnr_ref4 = _reference(preds_r, target_r, mask4)

    p4, t4, logs4 = video_metric_forward(preds_r, target_r, mask4)
    jax.block_until_ready((p4, t4, logs4))
    assert jnp.allclose(p4, p_ref4, atol=1e-6), "processed preds mismatch (ragged D)"
    assert jnp.allclose(t4, t_ref4, atol=1e-6), "processed target mismatch (ragged D)"
    assert jnp.allclose(logs4["val/mse"], mse_ref4, rtol=1e-5, atol=1e-8), "MSE mismatch (ragged D)"
    assert jnp.allclose(logs4["val/psnr"], psnr_ref4, rtol=1e-4, atol=1e-4), "PSNR mismatch (ragged D)"

    print("KERNEL_OK")
</pallas_src>

<mosaic_0001>
module attributes {stable_mosaic.version = 11 : i64} {
  func.func @kernel(%arg0: i32, %arg1: i32, %arg2: memref<32x1xf32, #tpu.memory_space<vmem>>, %arg3: memref<32x768xf32, #tpu.memory_space<vmem>>, %arg4: memref<32x768xf32, #tpu.memory_space<vmem>>, %arg5: memref<32x768xf32, #tpu.memory_space<vmem>>, %arg6: memref<32x768xf32, #tpu.memory_space<vmem>>, %arg7: memref<8x128xf32, #tpu.memory_space<vmem>>, %arg8: memref<32x128xf32, #tpu.memory_space<vmem>>) attributes {dimension_semantics = [#tpu.dimension_semantics<parallel>, #tpu.dimension_semantics<arbitrary>], iteration_bounds = array<i64: 1, 1>, scalar_prefetch = 0 : i64, scratch_operands = 1 : i64, tpu.core_type = #tpu.core_type<tc>, window_params = [{transform_indices = @transform_0, window_bounds = array<i64: 32, 1>}, {transform_indices = @transform_1, window_bounds = array<i64: 32, 768>}, {transform_indices = @transform_2, window_bounds = array<i64: 32, 768>}, {transform_indices = @transform_3, window_bounds = array<i64: 32, 768>}, {transform_indices = @transform_4, window_bounds = array<i64: 32, 768>}, {transform_indices = @transform_5, window_bounds = array<i64: 8, 128>}]} {
    %c0_i32 = arith.constant 0 : i32
    %0 = arith.cmpi eq, %arg1, %c0_i32 : i32
    %1 = arith.extui %0 : i1 to i32
    %c0_i32_0 = arith.constant 0 : i32
    %2 = arith.cmpi ne, %1, %c0_i32_0 : i32
    scf.if %2 {
      %cst_22 = arith.constant 0.000000e+00 : f32
      %46 = vector.broadcast %cst_22 : f32 to vector<32x128xf32>
      %c0_23 = arith.constant 0 : index
      %c0_24 = arith.constant 0 : index
      %47 = vector.load %arg8[%c0_23, %c0_24] : memref<32x128xf32, #tpu.memory_space<vmem>>, vector<32x128xf32>
      tpu.vector_store %arg8[%c0_23, %c0_24], %46 {strides = array<i32>} : memref<32x128xf32, #tpu.memory_space<vmem>>, vector<32x128xf32>,
    } else {
    }
    %c0 = arith.constant 0 : index
    %c0_1 = arith.constant 0 : index
    %3 = vector.load %arg3[%c0, %c0_1] : memref<32x768xf32, #tpu.memory_space<vmem>>, vector<32x768xf32>
    %c0_2 = arith.constant 0 : index
    %c0_3 = arith.constant 0 : index
    %4 = vector.load %arg4[%c0_2, %c0_3] : memref<32x768xf32, #tpu.memory_space<vmem>>, vector<32x768xf32>
    %c0_4 = arith.constant 0 : index
    %c0_5 = arith.constant 0 : index
    %5 = vector.load %arg2[%c0_4, %c0_5] : memref<32x1xf32, #tpu.memory_space<vmem>>, vector<32x1xf32>
    %6 = arith.cmpf one, %3, %3 : vector<32x768xf32>
    %cst = arith.constant 0.000000e+00 : f32
    %7 = vector.broadcast %cst : f32 to vector<32x768xf32>
    %8 = arith.select %6, %7, %3 : vector<32x768xi1>, vector<32x768xf32>
    %cst_6 = arith.constant 0.000000e+00 : f32
    %cst_7 = arith.constant 1.000000e+00 : f32
    %9 = vector.broadcast %cst_6 : f32 to vector<32x768xf32>
    %10 = arith.maximumf %9, %8 : vector<32x768xf32>
    %11 = vector.broadcast %cst_7 : f32 to vector<32x768xf32>
    %12 = arith.minimumf %11, %10 : vector<32x768xf32>
    %13 = arith.cmpf one, %4, %4 : vector<32x768xf32>
    %cst_8 = arith.constant 0.000000e+00 : f32
    %14 = vector.broadcast %cst_8 : f32 to vector<32x768xf32>
    %15 = arith.select %13, %14, %4 : vector<32x768xi1>, vector<32x768xf32>
    %cst_9 = arith.constant 0.000000e+00 : f32
    %cst_10 = arith.constant 1.000000e+00 : f32
    %16 = vector.broadcast %cst_9 : f32 to vector<32x768xf32>
    %17 = arith.maximumf %16, %15 : vector<32x768xf32>
    %18 = vector.broadcast %cst_10 : f32 to vector<32x768xf32>
    %19 = arith.minimumf %18, %17 : vector<32x768xf32>
    %cst_11 = arith.constant 5.000000e-01 : f32
    %20 = vector.broadcast %cst_11 : f32 to vector<32x1xf32>
    %21 = arith.cmpf ogt, %5, %20 : vector<32x1xf32>
    %22 = vector.shape_cast %21 : vector<32x1xi1> to vector<32x1xi1>
    %23 = vector.broadcast %22 : vector<32x1xi1> to vector<32x768xi1>
    %24 = arith.select %23, %19, %12 : vector<32x768xi1>, vector<32x768xf32>
    %c0_12 = arith.constant 0 : index
    %c0_13 = arith.constant 0 : index
    %25 = vector.load %arg5[%c0_12, %c0_13] : memref<32x768xf32, #tpu.memory_space<vmem>>, vector<32x768xf32>
    tpu.vector_store %arg5[%c0_12, %c0_13], %24 {strides = array<i32>} : memref<32x768xf32, #tpu.memory_space<vmem>>, vector<32x768xf32>,
    %c0_14 = arith.constant 0 : index
    %c0_15 = arith.constant 0 : index
    %26 = vector.load %arg6[%c0_14, %c0_15] : memref<32x768xf32, #tpu.memory_space<vmem>>, vector<32x768xf32>
    tpu.vector_store %arg6[%c0_14, %c0_15], %19 {strides = array<i32>} : memref<32x768xf32, #tpu.memory_space<vmem>>, vector<32x768xf32>,
    %27 = arith.subf %24, %19 : vector<32x768xf32>
    %28 = arith.mulf %27, %27 : vector<32x768xf32>
    %29 = vector.extract_strided_slice %28 {offsets = [0, 0], sizes = [32, 128], strides = [1, 1]} : vector<32x768xf32> to vector<32x128xf32>
    %30 = vector.extract_strided_slice %28 {offsets = [0, 128], sizes = [32, 128], strides = [1, 1]} : vector<32x768xf32> to vector<32x128xf32>
    %31 = arith.addf %29, %30 : vector<32x128xf32>
    %32 = vector.extract_strided_slice %28 {offsets = [0, 256], sizes = [32, 128], strides = [1, 1]} : vector<32x768xf32> to vector<32x128xf32>
    %33 = arith.addf %31, %32 : vector<32x128xf32>
    %34 = vector.extract_strided_slice %28 {offsets = [0, 384], sizes = [32, 128], strides = [1, 1]} : vector<32x768xf32> to vector<32x128xf32>
    %35 = arith.addf %33, %34 : vector<32x128xf32>
    %36 = vector.extract_strided_slice %28 {offsets = [0, 512], sizes = [32, 128], strides = [1, 1]} : vector<32x768xf32> to vector<32x128xf32>
    %37 = arith.addf %35, %36 : vector<32x128xf32>
    %38 = vector.extract_strided_slice %28 {offsets = [0, 640], sizes = [32, 128], strides = [1, 1]} : vector<32x768xf32> to vector<32x128xf32>
    %39 = arith.addf %37, %38 : vector<32x128xf32>
    %c0_16 = arith.constant 0 : index
    %c0_17 = arith.constant 0 : index
    %40 = vector.load %arg8[%c0_16, %c0_17] : memref<32x128xf32, #tpu.memory_space<vmem>>, vector<32x128xf32>
    %41 = arith.addf %40, %39 : vector<32x128xf32>
    %c0_18 = arith.constant 0 : index
    %c0_19 = arith.constant 0 : index
    %42 = vector.load %arg8[%c0_18, %c0_19] : memref<32x128xf32, #tpu.memory_space<vmem>>, vector<32x128xf32>
    tpu.vector_store %arg8[%c0_18, %c0_19], %41 {strides = array<i32>} : memref<32x128xf32, #tpu.memory_space<vmem>>, vector<32x128xf32>,
    %c0_i32_20 = arith.constant 0 : i32
    %43 = arith.cmpi eq, %arg1, %c0_i32_20 : i32
    %44 = arith.extui %43 : i1 to i32
    %c0_i32_21 = arith.constant 0 : i32
    %45 = arith.cmpi ne, %44, %c0_i32_21 : i32
    scf.if %45 {
      %c0_22 = arith.constant 0 : index
      %c0_23 = arith.constant 0 : index
      %46 = vector.load %arg8[%c0_22, %c0_23] : memref<32x128xf32, #tpu.memory_space<vmem>>, vector<32x128xf32>
      %47 = vector.extract_strided_slice %46 {offsets = [0, 0], sizes = [8, 128], strides = [1, 1]} : vector<32x128xf32> to vector<8x128xf32>
      %48 = vector.extract_strided_slice %46 {offsets = [8, 0], sizes = [8, 128], strides = [1, 1]} : vector<32x128xf32> to vector<8x128xf32>
      %49 = arith.addf %47, %48 : vector<8x128xf32>
      %50 = vector.extract_strided_slice %46 {offsets = [16, 0], sizes = [8, 128], strides = [1, 1]} : vector<32x128xf32> to vector<8x128xf32>
      %51 = arith.addf %49, %50 : vector<8x128xf32>
      %52 = vector.extract_strided_slice %46 {offsets = [24, 0], sizes = [8, 128], strides = [1, 1]} : vector<32x128xf32> to vector<8x128xf32>
      %53 = arith.addf %51, %52 : vector<8x128xf32>
      %c0_24 = arith.constant 0 : index
      %c0_25 = arith.constant 0 : index
      %54 = vector.load %arg7[%c0_24, %c0_25] : memref<8x128xf32, #tpu.memory_space<vmem>>, vector<8x128xf32>
      tpu.vector_store %arg7[%c0_24, %c0_25], %53 {strides = array<i32>} : memref<8x128xf32, #tpu.memory_space<vmem>>, vector<8x128xf32>,
    } else {
    }
    return
  }
  func.func @transform_0(%arg0: i32, %arg1: i32) -> (i32, i32) {
    %c0_i32 = arith.constant 0 : i32
    %c0_i32_0 = arith.constant 0 : i32
    return %arg0, %c0_i32 : i32, i32
  }
  func.func @transform_1(%arg0: i32, %arg1: i32) -> (i32, i32) {
    %c0_i32 = arith.constant 0 : i32
    return %arg0, %arg1 : i32, i32
  }
  func.func @transform_2(%arg0: i32, %arg1: i32) -> (i32, i32) {
    %c0_i32 = arith.constant 0 : i32
    return %arg0, %arg1 : i32, i32
  }
  func.func @transform_3(%arg0: i32, %arg1: i32) -> (i32, i32) {
    %c0_i32 = arith.constant 0 : i32
    return %arg0, %arg1 : i32, i32
  }
  func.func @transform_4(%arg0: i32, %arg1: i32) -> (i32, i32) {
    %c0_i32 = arith.constant 0 : i32
    return %arg0, %arg1 : i32, i32
  }
  func.func @transform_5(%arg0: i32, %arg1: i32) -> (i32, i32) {
    %c0_i32 = arith.constant 0 : i32
    %c0_i32_0 = arith.constant 0 : i32
    return %arg0, %c0_i32 : i32, i32
  }
}

</mosaic_0001>

<llo_original>
// kernel: tile.0
$region0: #{tile.0}
  %s0 = inlined_call_operand.vmem [shape: f32[4,8], index: 0, kind: input, shape index: {}]
  %s1 = inlined_call_operand.vmem [shape: f32[32,1], index: 1, kind: output, shape index: {}]
  $region1: #{tile.0} parent=0
    #allocation0 [shape = 'u8[4096]{0}', space=vmem, size = 0x1000, scoped, tag = 'scoped mem for input reshape']
    %s3 = sshllo.u32 0, 4
    %v4 = vld [vmem:[%s0] sm:%s3]
    %5 = vst [vmem:[#allocation0] sm:%s3] %v4
    %v6 = vld [vmem:[#allocation0] sm:$0xf]
    %vm7 = vcmask 7168
    %8 = vst.msk [vmem:[%s1] ss:$8 sm:$0xf] %vm7, %v6
    %v9 = vld [vmem:[#allocation0] sm:$0xf]
    %10 = vrot.lane.b32.xlu0 %v9, 127
    %v11 = vpop.permute.xlu0 %10
    %vm12 = vcmask 7168
    %s13 = scalar_lea.vmem %s1, 1
    %14 = vst.msk [vmem:[%s13] ss:$8 sm:$0xf] %vm12, %v11
    %v15 = vld [vmem:[#allocation0] sm:$0xf]
    %16 = vrot.lane.b32.xlu0 %v15, 126
    %v17 = vpop.permute.xlu0 %16
    %vm18 = vcmask 7168
    %s19 = scalar_lea.vmem %s1, 2
    %20 = vst.msk [vmem:[%s19] ss:$8 sm:$0xf] %vm18, %v17
    %v21 = vld [vmem:[#allocation0] sm:$0xf]
    %22 = vrot.lane.b32.xlu0 %v21, 125
    %v23 = vpop.permute.xlu0 %22
    %vm24 = vcmask 7168
    %s25 = scalar_lea.vmem %s1, 3
    %26 = vst.msk [vmem:[%s25] ss:$8 sm:$0xf] %vm24, %v23
    %v27 = vld [vmem:[#allocation0] sm:$0xf]
    %28 = vrot.lane.b32.xlu0 %v27, 124
    %v29 = vpop.permute.xlu0 %28
    %vm30 = vcmask 7168
    %s31 = scalar_lea.vmem %s1, 4
    %32 = vst.msk [vmem:[%s31] ss:$8 sm:$0xf] %vm30, %v29
    %v33 = vld [vmem:[#allocation0] sm:$0xf]
    %34 = vrot.lane.b32.xlu0 %v33, 123
    %v35 = vpop.permute.xlu0 %34
    %vm36 = vcmask 7168
    %s37 = scalar_lea.vmem %s1, 5
    %38 = vst.msk [vmem:[%s37] ss:$8 sm:$0xf] %vm36, %v35
    %v39 = vld [vmem:[#allocation0] sm:$0xf]
    %40 = vrot.lane.b32.xlu0 %v39, 122
    %v41 = vpop.permute.xlu0 %40
    %vm42 = vcmask 7168
    %s43 = scalar_lea.vmem %s1, 6
    %44 = vst.msk [vmem:[%s43] ss:$8 sm:$0xf] %vm42, %v41
    %v45 = vld [vmem:[#allocation0] sm:$0xf]
    %46 = vrot.lane.b32.xlu0 %v45, 121
    %v47 = vpop.permute.xlu0 %46
    %vm48 = vcmask 7168
    %s49 = scalar_lea.vmem %s1, 7
    %50 = vst.msk [vmem:[%s49] ss:$8 sm:$0xf] %vm48, %v47

// kernel: tile.6
$region0: #{tile.6}
  #allocation0 [shape = 's32[1]{0}', space=sflag, size = 0x4, scoped, tag = 'scoped memory for tile.6']
  %s0 = inlined_call_operand.vmem [shape: f32[8], index: 0, kind: input, shape index: {}]
  %s1 = inlined_call_operand.vmem [shape: f32[4,8], index: 1, kind: output, shape index: {}]
  // Predicated region
  $region2: #{tile.6} parent=0 // pred_check
    _
  $region3: #{tile.6} parent=0 // pred_check_branch
    %3 = sbr.rel (0) target = $region5
  $region4: #{tile.6} parent=0 // pred_region
    _
  $region5: #{tile.6} parent=0 // pred_fallthru
    _
  %v4 = vld [vmem:[%s0] ss:$0 sm:$0xff]
  %5 = vst [vmem:[%s1] sm:$0xf] %v4

// kernel: _video_metric_impl.1
$region0: #{_video_metric_impl.1}
  #allocation0 [shape = 'u32[]', space=smem, size = 0x4, offset = 0x4, fixed_abs, tag = 'smem constant byte address 0x4 - core index']
  #allocation1 [shape = 'u32[144,128]{1,0:T(1,128)}', space=vmem, size = 0x12000, scoped, tag = 'internal scratch']
  #allocation2 [shape = 'f32[32,128]{1,0:T(8,128)}', space=vmem, size = 0x4000, scoped, tag = 'scratch operand']
  %s0 = inlined_call_operand.vmem [shape: f32[32,1], index: 0, kind: input, shape index: {}]
  %s1 = inlined_call_operand.vmem [shape: f32[32,768], index: 1, kind: input, shape index: {}]
  %s2 = inlined_call_operand.vmem [shape: f32[32,768], index: 2, kind: input, shape index: {}]
  %s3 = inlined_call_operand.vmem [shape: f32[32,768], index: 3, kind: output, shape index: {0}]
  %s4 = inlined_call_operand.vmem [shape: f32[32,768], index: 4, kind: output, shape index: {1}]
  %s5 = inlined_call_operand.vmem [shape: f32[8,128], index: 5, kind: output, shape index: {2}]
  %6 = xla_tuple %s3, %s4, %s5
  %s7 = sld [smem:[#allocation0]]
  $region46: #{_video_metric_impl.1} parent=0
    _
  %s9 = ssub.s32 1, %s7
  %s10 = scalar_select 0, %s9, %s7
  // Predicated region
  $region2: #{_video_metric_impl.1} parent=0 // pred_check
    _
  $region3: #{_video_metric_impl.1} parent=0 // pred_check_branch
    %12 = sbr.rel (0) target = $region5
  $region4: #{_video_metric_impl.1} parent=0 // pred_region
    _
  $region5: #{_video_metric_impl.1} parent=0 // pred_fallthru
    _
  // Predicated region
  $region6: #{_video_metric_impl.1} parent=0 // pred_check
    _
  $region7: #{_video_metric_impl.1} parent=0 // pred_check_branch
    %14 = sbr.rel (0) target = $region9
  $region8: #{_video_metric_impl.1} parent=0 // pred_region
    _
  $region9: #{_video_metric_impl.1} parent=0 // pred_fallthru
    _
  // Predicated region
  $region10: #{_video_metric_impl.1} parent=0 // pred_check
    _
  $region11: #{_video_metric_impl.1} parent=0 // pred_check_branch
    %16 = sbr.rel (0) target = $region13
  $region12: #{_video_metric_impl.1} parent=0 // pred_region
    _
  $region13: #{_video_metric_impl.1} parent=0 // pred_fallthru
    _
  %p17 = scmp.eq.s32.totalorder 0, 0
  // Predicated region
  $region14: #{_video_metric_impl.1} parent=0 // pred_check
    %p18 = pneg %p17
  $region15: #{_video_metric_impl.1} parent=0 // pred_check_branch
    %20 = sbr.rel (%p18) target = $region17
  $region16: #{_video_metric_impl.1} parent=0 // pred_region
    %21 = vst [vmem:[#allocation2] sm:$0xff] 0.0
    %22 = vst [vmem:[#allocation2 + $0x8] sm:$0xff] 0.0
    %23 = vst [vmem:[#allocation2 + $0x10] sm:$0xff] 0.0
    %24 = vst [vmem:[#allocation2 + $0x18] sm:$0xff] 0.0
  $region17: #{_video_metric_impl.1} parent=0 // pred_fallthru
    _
  %v25 = vld [vmem:[%s1] sm:$0xff]
  %v26 = vld [vmem:[%s1 + $0x8] sm:$0xff]
  %v27 = vld [vmem:[%s1 + $0x10] sm:$0xff]
  %v28 = vld [vmem:[%s1 + $0x18] sm:$0xff]
  %v29 = vld [vmem:[%s1 + $0x20] sm:$0xff]
  %v30 = vld [vmem:[%s1 + $0x28] sm:$0xff]
  %v31 = vld [vmem:[%s1 + $0x30] sm:$0xff]
  %v32 = vld [vmem:[%s1 + $0x38] sm:$0xff]
  %v33 = vld [vmem:[%s1 + $0x40] sm:$0xff]
  %v34 = vld [vmem:[%s1 + $0x48] sm:$0xff]
  %v35 = vld [vmem:[%s1 + $0x50] sm:$0xff]
  %v36 = vld [vmem:[%s1 + $0x58] sm:$0xff]
  %v37 = vld [vmem:[%s1 + $0x60] sm:$0xff]
  %v38 = vld [vmem:[%s1 + $0x68] sm:$0xff]
  %v39 = vld [vmem:[%s1 + $0x70] sm:$0xff]
  %v40 = vld [vmem:[%s1 + $0x78] sm:$0xff]
  %v41 = vld [vmem:[%s1 + $0x80] sm:$0xff]
  %v42 = vld [vmem:[%s1 + $0x88] sm:$0xff]
  %v43 = vld [vmem:[%s1 + $0x90] sm:$0xff]
  %v44 = vld [vmem:[%s1 + $0x98] sm:$0xff]
  %v45 = vld [vmem:[%s1 + $0xa0] sm:$0xff]
  %v46 = vld [vmem:[%s1 + $0xa8] sm:$0xff]
  %v47 = vld [vmem:[%s1 + $0xb0] sm:$0xff]
  %v48 = vld [vmem:[%s1 + $0xb8] sm:$0xff]
  %v49 = vld [vmem:[%s2] sm:$0xff]
  %v50 = vld [vmem:[%s2 + $0x8] sm:$0xff]
  %v51 = vld [vmem:[%s2 + $0x10] sm:$0xff]
  %v52 = vld [vmem:[%s2 + $0x18] sm:$0xff]
  %v53 = vld [vmem:[%s2 + $0x20] sm:$0xff]
  %v54 = vld [vmem:[%s2 + $0x28] sm:$0xff]
  %v55 = vld [vmem:[%s2 + $0x30] sm:$0xff]
  %v56 = vld [vmem:[%s2 + $0x38] sm:$0xff]
  %v57 = vld [vmem:[%s2 + $0x40] sm:$0xff]
  %v58 = vld [vmem:[%s2 + $0x48] sm:$0xff]
  %v59 = vld [vmem:[%s2 + $0x50] sm:$0xff]
  %v60 = vld [vmem:[%s2 + $0x58] sm:$0xff]
  %v61 = vld [vmem:[%s2 + $0x60] sm:$0xff]
  %v62 = vld [vmem:[%s2 + $0x68] sm:$0xff]
  %v63 = vld [vmem:[%s2 + $0x70] sm:$0xff]
  %v64 = vld [vmem:[%s2 + $0x78] sm:$0xff]
  %v65 = vld [vmem:[%s2 + $0x80] sm:$0xff]
  %v66 = vld [vmem:[%s2 + $0x88] sm:$0xff]
  %v67 = vld [vmem:[%s2 + $0x90] sm:$0xff]
  %v68 = vld [vmem:[%s2 + $0x98] sm:$0xff]
  %v69 = vld [vmem:[%s2 + $0xa0] sm:$0xff]
  %v70 = vld [vmem:[%s2 + $0xa8] sm:$0xff]
  %v71 = vld [vmem:[%s2 + $0xb0] sm:$0xff]
  %v72 = vld [vmem:[%s2 + $0xb8] sm:$0xff]
  %v73 = vld [vmem:[%s0] sm:$0xff]
  %v74 = vld [vmem:[%s0 + $0x8] sm:$0xff]
  %v75 = vld [vmem:[%s0 + $0x10] sm:$0xff]
  %v76 = vld [vmem:[%s0 + $0x18] sm:$0xff]
  %vm77 = vcmp.ne.f32.partialorder %v25, %v25
  %vm78 = vcmp.ne.f32.partialorder %v26, %v26
  %vm79 = vcmp.ne.f32.partialorder %v27, %v27
  %vm80 = vcmp.ne.f32.partialorder %v28, %v28
  %vm81 = vcmp.ne.f32.partialorder %v29, %v29
  %vm82 = vcmp.ne.f32.partialorder %v30, %v30
  %vm83 = vcmp.ne.f32.partialorder %v31, %v31
  %vm84 = vcmp.ne.f32.partialorder %v32, %v32
  %vm85 = vcmp.ne.f32.partialorder %v33, %v33
  %vm86 = vcmp.ne.f32.partialorder %v34, %v34
  %vm87 = vcmp.ne.f32.partialorder %v35, %v35
  %vm88 = vcmp.ne.f32.partialorder %v36, %v36
  %vm89 = vcmp.ne.f32.partialorder %v37, %v37
  %vm90 = vcmp.ne.f32.partialorder %v38, %v38
  %vm91 = vcmp.ne.f32.partialorder %v39, %v39
  %vm92 = vcmp.ne.f32.partialorder %v40, %v40
  %vm93 = vcmp.ne.f32.partialorder %v41, %v41
  %vm94 = vcmp.ne.f32.partialorder %v42, %v42
  %vm95 = vcmp.ne.f32.partialorder %v43, %v43
  %vm96 = vcmp.ne.f32.partialorder %v44, %v44
  %vm97 = vcmp.ne.f32.partialorder %v45, %v45
  %vm98 = vcmp.ne.f32.partialorder %v46, %v46
  %vm99 = vcmp.ne.f32.partialorder %v47, %v47
  %vm100 = vcmp.ne.f32.partialorder %v48, %v48
  %v101 = vsel %vm77, 0.0, %v25
  %v102 = vsel %vm78, 0.0, %v26
  %v103 = vsel %vm79, 0.0, %v27
  %v104 = vsel %vm80, 0.0, %v28
  %v105 = vsel %vm81, 0.0, %v29
  %v106 = vsel %vm82, 0.0, %v30
  %v107 = vsel %vm83, 0.0, %v31
  %v108 = vsel %vm84, 0.0, %v32
  %v109 = vsel %vm85, 0.0, %v33
  %v110 = vsel %vm86, 0.0, %v34
  %v111 = vsel %vm87, 0.0, %v35
  %v112 = vsel %vm88, 0.0, %v36
  %v113 = vsel %vm89, 0.0, %v37
  %v114 = vsel %vm90, 0.0, %v38
  %v115 = vsel %vm91, 0.0, %v39
  %v116 = vsel %vm92, 0.0, %v40
  %v117 = vsel %vm93, 0.0, %v41
  %v118 = vsel %vm94, 0.0, %v42
  %v119 = vsel %vm95, 0.0, %v43
  %v120 = vsel %vm96, 0.0, %v44
  %v121 = vsel %vm97, 0.0, %v45
  %v122 = vsel %vm98, 0.0, %v46
  %v123 = vsel %vm99, 0.0, %v47
  %v124 = vsel %vm100, 0.0, %v48
  %v125 = vmax.f32 %v101, 0.0
  %v126 = vmax.f32 %v102, 0.0
  %v127 = vmax.f32 %v103, 0.0
  %v128 = vmax.f32 %v104, 0.0
  %v129 = vmax.f32 %v105, 0.0
  %v130 = vmax.f32 %v106, 0.0
  %v131 = vmax.f32 %v107, 0.0
  %v132 = vmax.f32 %v108, 0.0
  %v133 = vmax.f32 %v109, 0.0
  %v134 = vmax.f32 %v110, 0.0
  %v135 = vmax.f32 %v111, 0.0
  %v136 = vmax.f32 %v112, 0.0
  %v137 = vmax.f32 %v113, 0.0
  %v138 = vmax.f32 %v114, 0.0
  %v139 = vmax.f32 %v115, 0.0
  %v140 = vmax.f32 %v116, 0.0
  %v141 = vmax.f32 %v117, 0.0
  %v142 = vmax.f32 %v118, 0.0
  %v143 = vmax.f32 %v119, 0.0
  %v144 = vmax.f32 %v120, 0.0
  %v145 = vmax.f32 %v121, 0.0
  %v146 = vmax.f32 %v122, 0.0
  %v147 = vmax.f32 %v123, 0.0
  %v148 = vmax.f32 %v124, 0.0
  %v149 = vmin.f32 %v125, 1.0
  %v150 = vmin.f32 %v126, 1.0
  %v151 = vmin.f32 %v127, 1.0
  %v152 = vmin.f32 %v128, 1.0
  %v153 = vmin.f32 %v129, 1.0
  %v154 = vmin.f32 %v130, 1.0
  %v155 = vmin.f32 %v131, 1.0
  %v156 = vmin.f32 %v132, 1.0
  %v157 = vmin.f32 %v133, 1.0
  %v158 = vmin.f32 %v134, 1.0
  %v159 = vmin.f32 %v135, 1.0
  %v160 = vmin.f32 %v136, 1.0
  %v161 = vmin.f32 %v137, 1.0
  %v162 = vmin.f32 %v138, 1.0
  %v163 = vmin.f32 %v139, 1.0
  %v164 = vmin.f32 %v140, 1.0
  %v165 = vmin.f32 %v141, 1.0
  %v166 = vmin.f32 %v142, 1.0
  %v167 = vmin.f32 %v143, 1.0
  %v168 = vmin.f32 %v144, 1.0
  %v169 = vmin.f32 %v145, 1.0
  %v170 = vmin.f32 %v146, 1.0
  %v171 = vmin.f32 %v147, 1.0
  %v172 = vmin.f32 %v148, 1.0
  %vm173 = vcmp.ne.f32.partialorder %v49, %v49
  %vm174 = vcmp.ne.f32.partialorder %v50, %v50
  %vm175 = vcmp.ne.f32.partialorder %v51, %v51
  %vm176 = vcmp.ne.f32.partialorder %v52, %v52
  %vm177 = vcmp.ne.f32.partialorder %v53, %v53
  %vm178 = vcmp.ne.f32.partialorder %v54, %v54
  %vm179 = vcmp.ne.f32.partialorder %v55, %v55
  %vm180 = vcmp.ne.f32.partialorder %v56, %v56
  %vm181 = vcmp.ne.f32.partialorder %v57, %v57
  %vm182 = vcmp.ne.f32.partialorder %v58, %v58
  %vm183 = vcmp.ne.f32.partialorder %v59, %v59
  %vm184 = vcmp.ne.f32.partialorder %v60, %v60
  %vm185 = vcmp.ne.f32.partialorder %v61, %v61
  %vm186 = vcmp.ne.f32.partialorder %v62, %v62
  %vm187 = vcmp.ne.f32.partialorder %v63, %v63
  %vm188 = vcmp.ne.f32.partialorder %v64, %v64
  %vm189 = vcmp.ne.f32.partialorder %v65, %v65
  %vm190 = vcmp.ne.f32.partialorder %v66, %v66
  %vm191 = vcmp.ne.f32.partialorder %v67, %v67
  %vm192 = vcmp.ne.f32.partialorder %v68, %v68
  %vm193 = vcmp.ne.f32.partialorder %v69, %v69
  %vm194 = vcmp.ne.f32.partialorder %v70, %v70
  %vm195 = vcmp.ne.f32.partialorder %v71, %v71
  %vm196 = vcmp.ne.f32.partialorder %v72, %v72
  %v197 = vsel %vm173, 0.0, %v49
  %v198 = vsel %vm174, 0.0, %v50
  %v199 = vsel %vm175, 0.0, %v51
  %v200 = vsel %vm176, 0.0, %v52
  %v201 = vsel %vm177, 0.0, %v53
  %v202 = vsel %vm178, 0.0, %v54
  %v203 = vsel %vm179, 0.0, %v55
  %v204 = vsel %vm180, 0.0, %v56
  %v205 = vsel %vm181, 0.0, %v57
  %v206 = vsel %vm182, 0.0, %v58
  %v207 = vsel %vm183, 0.0, %v59
  %v208 = vsel %vm184, 0.0, %v60
  %v209 = vsel %vm185, 0.0, %v61
  %v210 = vsel %vm186, 0.0, %v62
  %v211 = vsel %vm187, 0.0, %v63
  %v212 = vsel %vm188, 0.0, %v64
  %v213 = vsel %vm189, 0.0, %v65
  %v214 = vsel %vm190, 0.0, %v66
  %v215 = vsel %vm191, 0.0, %v67
  %v216 = vsel %vm192, 0.0, %v68
  %v217 = vsel %vm193, 0.0, %v69
  %v218 = vsel %vm194, 0.0, %v70
  %v219 = vsel %vm195, 0.0, %v71
  %v220 = vsel %vm196, 0.0, %v72
  %v221 = vmax.f32 %v197, 0.0
  %v222 = vmax.f32 %v198, 0.0
  %v223 = vmax.f32 %v199, 0.0
  %v224 = vmax.f32 %v200, 0.0
  %v225 = vmax.f32 %v201, 0.0
  %v226 = vmax.f32 %v202, 0.0
  %v227 = vmax.f32 %v203, 0.0
  %v228 = vmax.f32 %v204, 0.0
  %v229 = vmax.f32 %v205, 0.0
  %v230 = vmax.f32 %v206, 0.0
  %v231 = vmax.f32 %v207, 0.0
  %v232 = vmax.f32 %v208, 0.0
  %v233 = vmax.f32 %v209, 0.0
  %v234 = vmax.f32 %v210, 0.0
  %v235 = vmax.f32 %v211, 0.0
  %v236 = vmax.f32 %v212, 0.0
  %v237 = vmax.f32 %v213, 0.0
  %v238 = vmax.f32 %v214, 0.0
  %v239 = vmax.f32 %v215, 0.0
  %v240 = vmax.f32 %v216, 0.0
  %v241 = vmax.f32 %v217, 0.0
  %v242 = vmax.f32 %v218, 0.0
  %v243 = vmax.f32 %v219, 0.0
  %v244 = vmax.f32 %v220, 0.0
  %v245 = vmin.f32 %v221, 1.0
  %v246 = vmin.f32 %v222, 1.0
  %v247 = vmin.f32 %v223, 1.0
  %v248 = vmin.f32 %v224, 1.0
  %v249 = vmin.f32 %v225, 1.0
  %v250 = vmin.f32 %v226, 1.0
  %v251 = vmin.f32 %v227, 1.0
  %v252 = vmin.f32 %v228, 1.0
  %v253 = vmin.f32 %v229, 1.0
  %v254 = vmin.f32 %v230, 1.0
  %v255 = vmin.f32 %v231, 1.0
  %v256 = vmin.f32 %v232, 1.0
  %v257 = vmin.f32 %v233, 1.0
  %v258 = vmin.f32 %v234, 1.0
  %v259 = vmin.f32 %v235, 1.0
  %v260 = vmin.f32 %v236, 1.0
  %v261 = vmin.f32 %v237, 1.0
  %v262 = vmin.f32 %v238, 1.0
  %v263 = vmin.f32 %v239, 1.0
  %v264 = vmin.f32 %v240, 1.0
  %v265 = vmin.f32 %v241, 1.0
  %v266 = vmin.f32 %v242, 1.0
  %v267 = vmin.f32 %v243, 1.0
  %v268 = vmin.f32 %v244, 1.0
  %vm269 = vcmp.gt.f32.partialorder %v73, 0.5
  %vm270 = vcmp.gt.f32.partialorder %v74, 0.5
  %vm271 = vcmp.gt.f32.partialorder %v75, 0.5
  %vm272 = vcmp.gt.f32.partialorder %v76, 0.5
  %v273 = vsel %vm269, 1, 0
  %v274 = vsel %vm270, 1, 0
  %v275 = vsel %vm271, 1, 0
  %v276 = vsel %vm272, 1, 0
  %277 = vset.pattern.permute.xlu0 0
  %278 = vperm.xlu0 %277, %v273
  %v279 = vpop.permute.xlu0 %278
  %280 = vset.pattern.permute.xlu0 0
  %281 = vperm.xlu0 %280, %v274
  %v282 = vpop.permute.xlu0 %281
  %283 = vset.pattern.permute.xlu0 0
  %284 = vperm.xlu0 %283, %v275
  %v285 = vpop.permute.xlu0 %284
  %286 = vset.pattern.permute.xlu0 0
  %287 = vperm.xlu0 %286, %v276
  %v288 = vpop.permute.xlu0 %287
  %vm289 = vcmp.eq.s32.totalorder %v279, 1
  %vm290 = vcmp.eq.s32.totalorder %v282, 1
  %vm291 = vcmp.eq.s32.totalorder %v285, 1
  %vm292 = vcmp.eq.s32.totalorder %v288, 1
  %v293 = vsel %vm289, %v245, %v149
  %v294 = vsel %vm289, %v246, %v150
  %v295 = vsel %vm289, %v247, %v151
  %v296 = vsel %vm289, %v248, %v152
  %v297 = vsel %vm289, %v249, %v153
  %v298 = vsel %vm289, %v250, %v154
  %v299 = vsel %vm290, %v251, %v155
  %v300 = vsel %vm290, %v252, %v156
  %v301 = vsel %vm290, %v253, %v157
  %v302 = vsel %vm290, %v254, %v158
  %v303 = vsel %vm290, %v255, %v159
  %v304 = vsel %vm290, %v256, %v160
  %v305 = vsel %vm291, %v257, %v161
  %v306 = vsel %vm291, %v258, %v162
  %v307 = vsel %vm291, %v259, %v163
  %v308 = vsel %vm291, %v260, %v164
  %v309 = vsel %vm291, %v261, %v165
  %v310 = vsel %vm291, %v262, %v166
  %v311 = vsel %vm292, %v263, %v167
  %v312 = vsel %vm292, %v264, %v168
  %v313 = vsel %vm292, %v265, %v169
  %v314 = vsel %vm292, %v266, %v170
  %v315 = vsel %vm292, %v267, %v171
  %v316 = vsel %vm292, %v268, %v172
  %317 = vst [vmem:[%s3] sm:$0xff] %v293
  %318 = vst [vmem:[%s3 + $0x8] sm:$0xff] %v294
  %319 = vst [vmem:[%s3 + $0x10] sm:$0xff] %v295
  %320 = vst [vmem:[%s3 + $0x18] sm:$0xff] %v296
  %321 = vst [vmem:[%s3 + $0x20] sm:$0xff] %v297
  %322 = vst [vmem:[%s3 + $0x28] sm:$0xff] %v298
  %323 = vst [vmem:[%s3 + $0x30] sm:$0xff] %v299
  %324 = vst [vmem:[%s3 + $0x38] sm:$0xff] %v300
  %325 = vst [vmem:[%s3 + $0x40] sm:$0xff] %v301
  %326 = vst [vmem:[%s3 + $0x48] sm:$0xff] %v302
  %327 = vst [vmem:[%s3 + $0x50] sm:$0xff] %v303
  %328 = vst [vmem:[%s3 + $0x58] sm:$0xff] %v304
  %329 = vst [vmem:[%s3 + $0x60] sm:$0xff] %v305
  %330 = vst [vmem:[%s3 + $0x68] sm:$0xff] %v306
  %331 = vst [vmem:[%s3 + $0x70] sm:$0xff] %v307
  %332 = vst [vmem:[%s3 + $0x78] sm:$0xff] %v308
  %333 = vst [vmem:[%s3 + $0x80] sm:$0xff] %v309
  %334 = vst [vmem:[%s3 + $0x88] sm:$0xff] %v310
  %335 = vst [vmem:[%s3 + $0x90] sm:$0xff] %v311
  %336 = vst [vmem:[%s3 + $0x98] sm:$0xff] %v312
  %337 = vst [vmem:[%s3 + $0xa0] sm:$0xff] %v313
  %338 = vst [vmem:[%s3 + $0xa8] sm:$0xff] %v314
  %339 = vst [vmem:[%s3 + $0xb0] sm:$0xff] %v315
  %340 = vst [vmem:[%s3 + $0xb8] sm:$0xff] %v316
  %341 = vst [vmem:[%s4] sm:$0xff] %v245
  %342 = vst [vmem:[%s4 + $0x8] sm:$0xff] %v246
  %343 = vst [vmem:[%s4 + $0x10] sm:$0xff] %v247
  %344 = vst [vmem:[%s4 + $0x18] sm:$0xff] %v248
  %345 = vst [vmem:[%s4 + $0x20] sm:$0xff] %v249
  %346 = vst [vmem:[%s4 + $0x28] sm:$0xff] %v250
  %347 = vst [vmem:[%s4 + $0x30] sm:$0xff] %v251
  %348 = vst [vmem:[%s4 + $0x38] sm:$0xff] %v252
  %349 = vst [vmem:[%s4 + $0x40] sm:$0xff] %v253
  %350 = vst [vmem:[%s4 + $0x48] sm:$0xff] %v254
  %351 = vst [vmem:[%s4 + $0x50] sm:$0xff] %v255
  %352 = vst [vmem:[%s4 + $0x58] sm:$0xff] %v256
  %353 = vst [vmem:[%s4 + $0x60] sm:$0xff] %v257
  %354 = vst [vmem:[%s4 + $0x68] sm:$0xff] %v258
  %355 = vst [vmem:[%s4 + $0x70] sm:$0xff] %v259
  %356 = vst [vmem:[%s4 + $0x78] sm:$0xff] %v260
  %357 = vst [vmem:[%s4 + $0x80] sm:$0xff] %v261
  %358 = vst [vmem:[%s4 + $0x88] sm:$0xff] %v262
  %359 = vst [vmem:[%s4 + $0x90] sm:$0xff] %v263
  %360 = vst [vmem:[%s4 + $0x98] sm:$0xff] %v264
  %361 = vst [vmem:[%s4 + $0xa0] sm:$0xff] %v265
  %362 = vst [vmem:[%s4 + $0xa8] sm:$0xff] %v266
  %363 = vst [vmem:[%s4 + $0xb0] sm:$0xff] %v267
  %364 = vst [vmem:[%s4 + $0xb8] sm:$0xff] %v268
  %v365 = vsub.f32 %v293, %v245
  %v366 = vsub.f32 %v294, %v246
  %v367 = vsub.f32 %v295, %v247
  %v368 = vsub.f32 %v296, %v248
  %v369 = vsub.f32 %v297, %v249
  %v370 = vsub.f32 %v298, %v250
  %v371 = vsub.f32 %v299, %v251
  %v372 = vsub.f32 %v300, %v252
  %v373 = vsub.f32 %v301, %v253
  %v374 = vsub.f32 %v302, %v254
  %v375 = vsub.f32 %v303, %v255
  %v376 = vsub.f32 %v304, %v256
  %v377 = vsub.f32 %v305, %v257
  %v378 = vsub.f32 %v306, %v258
  %v379 = vsub.f32 %v307, %v259
  %v380 = vsub.f32 %v308, %v260
  %v381 = vsub.f32 %v309, %v261
  %v382 = vsub.f32 %v310, %v262
  %v383 = vsub.f32 %v311, %v263
  %v384 = vsub.f32 %v312, %v264
  %v385 = vsub.f32 %v313, %v265
  %v386 = vsub.f32 %v314, %v266
  %v387 = vsub.f32 %v315, %v267
  %v388 = vsub.f32 %v316, %v268
  %v389 = vmul.f32 %v365, %v365
  %v390 = vmul.f32 %v366, %v366
  %v391 = vmul.f32 %v367, %v367
  %v392 = vmul.f32 %v368, %v368
  %v393 = vmul.f32 %v369, %v369
  %v394 = vmul.f32 %v370, %v370
  %v395 = vmul.f32 %v371, %v371
  %v396 = vmul.f32 %v372, %v372
  %v397 = vmul.f32 %v373, %v373
  %v398 = vmul.f32 %v374, %v374
  %v399 = vmul.f32 %v375, %v375
  %v400 = vmul.f32 %v376, %v376
  %v401 = vmul.f32 %v377, %v377
  %v402 = vmul.f32 %v378, %v378
  %v403 = vmul.f32 %v379, %v379
  %v404 = vmul.f32 %v380, %v380
  %v405 = vmul.f32 %v381, %v381
  %v406 = vmul.f32 %v382, %v382
  %v407 = vmul.f32 %v383, %v383
  %v408 = vmul.f32 %v384, %v384
  %v409 = vmul.f32 %v385, %v385
  %v410 = vmul.f32 %v386, %v386
  %v411 = vmul.f32 %v387, %v387
  %v412 = vmul.f32 %v388, %v388
  %v413 = vadd.f32 %v389, %v390
  %v414 = vadd.f32 %v395, %v396
  %v415 = vadd.f32 %v401, %v402
  %v416 = vadd.f32 %v407, %v408
  %v417 = vadd.f32 %v413, %v391
  %v418 = vadd.f32 %v414, %v397
  %v419 = vadd.f32 %v415, %v403
  %v420 = vadd.f32 %v416, %v409
  %v421 = vadd.f32 %v417, %v392
  %v422 = vadd.f32 %v418, %v398
  %v423 = vadd.f32 %v419, %v404
  %v424 = vadd.f32 %v420, %v410
  %v425 = vadd.f32 %v421, %v393
  %v426 = vadd.f32 %v422, %v399
  %v427 = vadd.f32 %v423, %v405
  %v428 = vadd.f32 %v424, %v411
  %v429 = vadd.f32 %v425, %v394
  %v430 = vadd.f32 %v426, %v400
  %v431 = vadd.f32 %v427, %v406
  %v432 = vadd.f32 %v428, %v412
  %v433 = vld [vmem:[#allocation2] sm:$0xff]
  %v434 = vld [vmem:[#allocation2 + $0x8] sm:$0xff]
  %v435 = vld [vmem:[#allocation2 + $0x10] sm:$0xff]
  %v436 = vld [vmem:[#allocation2 + $0x18] sm:$0xff]
  %v437 = vadd.f32 %v433, %v429
  %v438 = vadd.f32 %v434, %v430
  %v439 = vadd.f32 %v435, %v431
  %v440 = vadd.f32 %v436, %v432
  %441 = vst [vmem:[#allocation2] sm:$0xff] %v437
  %442 = vst [vmem:[#allocation2 + $0x8] sm:$0xff] %v438
  %443 = vst [vmem:[#allocation2 + $0x10] sm:$0xff] %v439
  %444 = vst [vmem:[#allocation2 + $0x18] sm:$0xff] %v440
  // Predicated region
  $region18: #{_video_metric_impl.1} parent=0 // pred_check
    %p445 = pneg %p17
  $region19: #{_video_metric_impl.1} parent=0 // pred_check_branch
    %447 = sbr.rel (%p445) target = $region21
  $region20: #{_video_metric_impl.1} parent=0 // pred_region
    %v448 = vld [vmem:[#allocation2] sm:$0xff]
    %v449 = vld [vmem:[#allocation2 + $0x8] sm:$0xff]
    %v450 = vld [vmem:[#allocation2 + $0x10] sm:$0xff]
    %v451 = vld [vmem:[#allocation2 + $0x18] sm:$0xff]
    %v452 = vadd.f32 %v448, %v449
    %v453 = vadd.f32 %v452, %v450
    %v454 = vadd.f32 %v453, %v451
    %455 = vst [vmem:[%s5] sm:$0xff] %v454
  $region21: #{_video_metric_impl.1} parent=0 // pred_fallthru
    _
  // Predicated region
  $region22: #{_video_metric_impl.1} parent=0 // pred_check
    _
  $region23: #{_video_metric_impl.1} parent=0 // pred_check_branch
    %457 = sbr.rel (0) target = $region25
  $region24: #{_video_metric_impl.1} parent=0 // pred_region
    _
  $region25: #{_video_metric_impl.1} parent=0 // pred_fallthru
    _
  // Predicated region
  $region26: #{_video_metric_impl.1} parent=0 // pred_check
    _
  $region27: #{_video_metric_impl.1} parent=0 // pred_check_branch
    %459 = sbr.rel (0) target = $region29
  $region28: #{_video_metric_impl.1} parent=0 // pred_region
    _
  $region29: #{_video_metric_impl.1} parent=0 // pred_fallthru
    _
  // Predicated region
  $region30: #{_video_metric_impl.1} parent=0 // pred_check
    _
  $region31: #{_video_metric_impl.1} parent=0 // pred_check_branch
    %461 = sbr.rel (0) target = $region33
  $region32: #{_video_metric_impl.1} parent=0 // pred_region
    _
  $region33: #{_video_metric_impl.1} parent=0 // pred_fallthru
    _
  // Predicated region
  $region34: #{_video_metric_impl.1} parent=0 // pred_check
    _
  $region35: #{_video_metric_impl.1} parent=0 // pred_check_branch
    %463 = sbr.rel (0) target = $region37
  $region36: #{_video_metric_impl.1} parent=0 // pred_region
    _
  $region37: #{_video_metric_impl.1} parent=0 // pred_fallthru
    _
  // Predicated region
  $region38: #{_video_metric_impl.1} parent=0 // pred_check
    _
  $region39: #{_video_metric_impl.1} parent=0 // pred_check_branch
    %465 = sbr.rel (0) target = $region41
  $region40: #{_video_metric_impl.1} parent=0 // pred_region
    _
  $region41: #{_video_metric_impl.1} parent=0 // pred_fallthru
    _
  // Predicated region
  $region42: #{_video_metric_impl.1} parent=0 // pred_check
    _
  $region43: #{_video_metric_impl.1} parent=0 // pred_check_branch
    %467 = sbr.rel (0) target = $region45
  $region44: #{_video_metric_impl.1} parent=0 // pred_region
    _
  $region45: #{_video_metric_impl.1} parent=0 // pred_fallthru
    _

</llo_original>
